<compile_context>
chip_gen: v7x
topology: tpu7x:2x2x1
jax: 0.10.0
libtpu: 0.0.40
codegen_flags: <defaults>
</compile_context>

<pallas_src>
import functools

import jax
import jax.numpy as jnp
from jax.experimental import pallas as pl
from jax.experimental.pallas import tpu as pltpu


# ----------------------------------------------------------------------------
# AlexNet `features` architecture (torchvision), indexed like the nn.Sequential
# ----------------------------------------------------------------------------
_ALEXNET_FEATURES = [
    ("conv",    dict(cin=3,   cout=64,  k=11, stride=4, pad=2)),  # 0
    ("relu",    None),                                            # 1
    ("maxpool", dict(k=3, stride=2)),                             # 2
    ("conv",    dict(cin=64,  cout=192, k=5,  stride=1, pad=2)),  # 3
    ("relu",    None),                                            # 4
    ("maxpool", dict(k=3, stride=2)),                             # 5
    ("conv",    dict(cin=192, cout=384, k=3,  stride=1, pad=1)),  # 6
    ("relu",    None),                                            # 7
    ("conv",    dict(cin=384, cout=256, k=3,  stride=1, pad=1)),  # 8
    ("relu",    None),                                            # 9
    ("conv",    dict(cin=256, cout=256, k=3,  stride=1, pad=1)),  # 10
    ("relu",    None),                                            # 11
    ("maxpool", dict(k=3, stride=2)),                             # 12
]


def _ceil_to(x, m):
    return ((x + m - 1) // m) * m


# ----------------------------------------------------------------------------
# Pallas kernels
# ----------------------------------------------------------------------------
def _conv_gemm_kernel(x_ref, w_ref, b_ref, o_ref, acc_ref, *, relu):
    # x_ref: (tm, tk) bf16 im2col tile, w_ref: (tk, Cout_pad) bf16,
    # b_ref: (1, Cout_pad) f32, acc_ref: (tm, Cout_pad) f32 VMEM scratch.
    @pl.when(pl.program_id(1) == 0)
    def _():
        acc_ref[...] = jnp.zeros_like(acc_ref)

    acc_ref[...] += jnp.dot(x_ref[...], w_ref[...],
                            preferred_element_type=jnp.float32)

    @pl.when(pl.program_id(1) == pl.num_programs(1) - 1)
    def _():
        out = acc_ref[...] + b_ref[...]
        if relu:
            out = jnp.maximum(out, 0.0)
        o_ref[...] = out.astype(o_ref.dtype)


def _max_reduce_kernel(w_ref, o_ref):
    # w_ref: (ksize, tp, C) row-shifted windows; reduce over the window axis.
    o_ref[...] = jnp.max(w_ref[...], axis=0)


def _relu_kernel(x_ref, o_ref):
    o_ref[...] = jnp.maximum(x_ref[...], 0.0)


# ----------------------------------------------------------------------------
# Pallas-backed layer wrappers (NHWC)
# ----------------------------------------------------------------------------
def conv2d_pallas(x_nhwc, w_oihw, bias, *, stride, padding, relu):
    """Conv2d (+ optional fused ReLU). Weight is PyTorch OIHW."""
    N, H, W, Cin = x_nhwc.shape
    Cout, Cin_w, KH, KW = w_oihw.shape
    assert Cin == Cin_w
    out_dtype = x_nhwc.dtype

    # bf16 operands: MXU-native on v5e/v6e/v7x and halves HBM traffic on the
    # (dominant) im2col stream. Accumulation stays in f32 inside the kernel.
    xp = jnp.pad(x_nhwc.astype(jnp.bfloat16),
                 ((0, 0), (padding, padding), (padding, padding), (0, 0)))
    Hp, Wp = H + 2 * padding, W + 2 * padding
    OH = (Hp - KH) // stride + 1
    OW = (Wp - KW) // stride + 1

    # im2col (glue, bf16): shifted strided views concatenated along channels.
    # TODO(synk): forming patches in-kernel from the padded input would remove the
    # KH*KW HBM blow-up entirely; kept in the wrapper (in bf16) for robust lowering.
    cols = []
    for kh in range(KH):
        for kw in range(KW):
            cols.append(xp[:, kh:kh + stride * OH:stride, kw:kw + stride * OW:stride, :])
    patches = jnp.concatenate(cols, axis=-1)            # (N, OH, OW, KH*KW*Cin) bf16

    K = KH * KW * Cin
    M = N * OH * OW

    # K tiling: pad K to nk * tk with tk a multiple of 128 (lane-aligned lhs /
    # sublane-aligned weights) and tk <= 1024 so tiles stay small on v7x's VMEM.
    K128 = _ceil_to(K, 128)
    nk = -(-K128 // 1024)
    tk = _ceil_to(-(-K128 // nk), 128)
    K_pad = nk * tk

    # M tile: 256 fills the 256-wide MXU on v6e/v7x; multiple of 16 for bf16 sublanes.
    tm = min(256, _ceil_to(M, 16))
    M_pad = _ceil_to(M, tm)

    # Lane-dense output: Cout below 128 is padded up to 128 to avoid masked stores.
    Cout_pad = 128 if Cout < 128 else Cout

    lhs = patches.reshape(M, K)
    lhs = jnp.pad(lhs, ((0, M_pad - M), (0, K_pad - K)))

    # OIHW -> (KH, KW, Cin, Cout) -> (K, Cout), matching the im2col channel order.
    w = jnp.transpose(w_oihw, (2, 3, 1, 0)).reshape(K, Cout).astype(jnp.bfloat16)
    w = jnp.pad(w, ((0, K_pad - K), (0, Cout_pad - Cout)))
    b2 = jnp.pad(bias.astype(jnp.float32).reshape(1, Cout),
                 ((0, 0), (0, Cout_pad - Cout)))

    cost = pl.CostEstimate(
        flops=2 * M_pad * K_pad * Cout_pad,
        transcendentals=0,
        bytes_accessed=(M_pad * K_pad * 2                      # lhs (bf16)
                        + (M_pad // tm) * K_pad * Cout_pad * 2  # weight re-reads (bf16)
                        + M_pad * Cout_pad * 4                  # output (f32)
                        + Cout_pad * 4),                        # bias
    )

    out = pl.pallas_call(
        functools.partial(_conv_gemm_kernel, relu=relu),
        out_shape=jax.ShapeDtypeStruct((M_pad, Cout_pad), out_dtype),
        grid_spec=pltpu.PrefetchScalarGridSpec(
            num_scalar_prefetch=0,
            grid=(M_pad // tm, K_pad // tk),
            in_specs=[
                pl.BlockSpec((tm, tk), lambda i, k: (i, k)),
                pl.BlockSpec((tk, Cout_pad), lambda i, k: (k, 0)),
                pl.BlockSpec((1, Cout_pad), lambda i, k: (0, 0)),
            ],
            out_specs=pl.BlockSpec((tm, Cout_pad), lambda i, k: (i, 0)),
            scratch_shapes=[pltpu.VMEM((tm, Cout_pad), jnp.float32)],
        ),
        compiler_params=pltpu.CompilerParams(
            dimension_semantics=("parallel", "arbitrary"),
            vmem_limit_bytes=32 * 1024 * 1024,
        ),
        cost_estimate=cost,
    )(lhs, w, b2)

    return out[:M, :Cout].reshape(N, OH, OW, Cout)


def maxpool2d_pallas(x_nhwc, *, ksize, stride):
    N, H, W, C = x_nhwc.shape
    OH = (H - ksize) // stride + 1
    OW = (W - ksize) // stride + 1

    # Column-direction max as a fused jnp.maximum tree (no ksize^2 stack in HBM).
    cm = x_nhwc[:, :, 0:stride * OW:stride, :]
    for kw in range(1, ksize):
        cm = jnp.maximum(cm, x_nhwc[:, :, kw:kw + stride * OW:stride, :])
    # cm: (N, H, OW, C)

    # Row-direction: ksize shifted strided views, reduced in the Pallas kernel.
    rows = [cm[:, kh:kh + stride * OH:stride, :, :] for kh in range(ksize)]
    P = N * OH * OW
    wins = jnp.stack(rows, axis=0).reshape(ksize, P, C)

    tp = min(512, _ceil_to(P, 8))
    P_pad = _ceil_to(P, tp)
    wins = jnp.pad(wins, ((0, 0), (0, P_pad - P), (0, 0)))  # pad rows are sliced off

    out = pl.pallas_call(
        _max_reduce_kernel,
        out_shape=jax.ShapeDtypeStruct((P_pad, C), x_nhwc.dtype),
        grid_spec=pltpu.PrefetchScalarGridSpec(
            num_scalar_prefetch=0,
            grid=(P_pad // tp,),
            in_specs=[pl.BlockSpec((ksize, tp, C), lambda i: (0, i, 0))],
            out_specs=pl.BlockSpec((tp, C), lambda i: (i, 0)),
        ),
        compiler_params=pltpu.CompilerParams(dimension_semantics=("parallel",)),
    )(wins)

    return out[:P].reshape(N, OH, OW, C)


def relu_pallas(x_nhwc):
    # Only used when net_num splits a conv from its ReLU (normally fused).
    N, H, W, C = x_nhwc.shape
    P = N * H * W
    tp = min(512, _ceil_to(P, 8))
    P_pad = _ceil_to(P, tp)
    xf = jnp.pad(x_nhwc.reshape(P, C), ((0, P_pad - P), (0, 0)))
    out = pl.pallas_call(
        _relu_kernel,
        out_shape=jax.ShapeDtypeStruct((P_pad, C), x_nhwc.dtype),
        grid_spec=pltpu.PrefetchScalarGridSpec(
            num_scalar_prefetch=0,
            grid=(P_pad // tp,),
            in_specs=[pl.BlockSpec((tp, C), lambda i: (i, 0))],
            out_specs=pl.BlockSpec((tp, C), lambda i: (i, 0)),
        ),
        compiler_params=pltpu.CompilerParams(dimension_semantics=("parallel",)),
    )(xf)
    return out[:P].reshape(N, H, W, C)


# ----------------------------------------------------------------------------
# AlxLayerAct forward: run the first `net_num` layers of AlexNet.features
# ----------------------------------------------------------------------------
def alx_layer_act_forward(params, x_nchw, net_num):
    x = jnp.transpose(x_nchw, (0, 2, 3, 1))  # NCHW -> NHWC
    i = 0
    while i < net_num:
        kind, cfg = _ALEXNET_FEATURES[i]
        if kind == "conv":
            fuse = (i + 1 < net_num) and _ALEXNET_FEATURES[i + 1][0] == "relu"
            w, b = params[i]
            x = conv2d_pallas(x, w, b, stride=cfg["stride"], padding=cfg["pad"], relu=fuse)
            i += 2 if fuse else 1
        elif kind == "relu":
            x = relu_pallas(x)
            i += 1
        else:  # maxpool
            x = maxpool2d_pallas(x, ksize=cfg["k"], stride=cfg["stride"])
            i += 1
    return jnp.transpose(x, (0, 3, 1, 2))  # back to NCHW


def init_params(key, net_num):
    params = {}
    for i, (kind, cfg) in enumerate(_ALEXNET_FEATURES[:net_num]):
        if kind == "conv":
            key, kw, kb = jax.random.split(key, 3)
            fan_in = cfg["cin"] * cfg["k"] * cfg["k"]
            w = jax.random.normal(
                kw, (cfg["cout"], cfg["cin"], cfg["k"], cfg["k"]), jnp.float32
            ) / jnp.sqrt(float(fan_in))
            b = jax.random.normal(kb, (cfg["cout"],), jnp.float32) * 0.01
            params[i] = (w, b)
    return params


# Pure-JAX reference mirroring the PyTorch NCHW semantics exactly (f32).
def reference_forward(params, x_nchw, net_num):
    x = x_nchw
    for i, (kind, cfg) in enumerate(_ALEXNET_FEATURES[:net_num]):
        if kind == "conv":
            w, b = params[i]
            x = jax.lax.conv_general_dilated(
                x, w, (cfg["stride"], cfg["stride"]),
                [(cfg["pad"], cfg["pad"]), (cfg["pad"], cfg["pad"])],
                dimension_numbers=("NCHW", "OIHW", "NCHW"),
            ) + b[None, :, None, None]
        elif kind == "relu":
            x = jnp.maximum(x, 0.0)
        else:
            x = jax.lax.reduce_window(
                x, -jnp.inf, jax.lax.max,
                (1, 1, cfg["k"], cfg["k"]), (1, 1, cfg["stride"], cfg["stride"]), "VALID",
            )
    return x


if __name__ == "__main__":
    key = jax.random.PRNGKey(0)
    key, kx = jax.random.split(key)
    x = jax.random.normal(kx, (2, 3, 64, 64), jnp.float32)  # small NCHW input

    # net_num=3: conv(3->64,k11,s4,p2)+ReLU (fused) + maxpool(3,2)
    # net_num=6: ... + conv(64->192,k5,p2)+ReLU (fused) + maxpool(3,2)
    for net_num in (3, 6):
        params = init_params(jax.random.PRNGKey(0), net_num)
        out = jax.block_until_ready(alx_layer_act_forward(params, x, net_num))
        ref = jax.block_until_ready(reference_forward(params, x, net_num))
        assert out.shape == ref.shape, (net_num, out.shape, ref.shape)
        max_err = float(jnp.max(jnp.abs(out - ref)))
        assert jnp.allclose(out, ref, atol=5e-2, rtol=5e-2), (net_num, max_err)

    print("KERNEL_OK")
</pallas_src>

<mosaic_0001>
module attributes {stable_mosaic.version = 11 : i64} {
  func.func @_conv_gemm_kernel(%arg0: i32, %arg1: i32, %arg2: memref<256x384xbf16, #tpu.memory_space<vmem>>, %arg3: memref<384x128xbf16, #tpu.memory_space<vmem>>, %arg4: memref<1x128xf32, #tpu.memory_space<vmem>>, %arg5: memref<256x128xf32, #tpu.memory_space<vmem>>, %arg6: memref<256x128xf32, #tpu.memory_space<vmem>>) attributes {dimension_semantics = [#tpu.dimension_semantics<parallel>, #tpu.dimension_semantics<arbitrary>], iteration_bounds = array<i64: 2, 1>, scalar_prefetch = 0 : i64, scratch_operands = 1 : i64, tpu.core_type = #tpu.core_type<tc>, window_params = [{transform_indices = @transform_0, window_bounds = array<i64: 256, 384>}, {transform_indices = @transform_1, window_bounds = array<i64: 384, 128>}, {pipeline_mode = #tpu.pipeline_mode<synchronous>, transform_indices = @transform_2, window_bounds = array<i64: 1, 128>}, {transform_indices = @transform_3, window_bounds = array<i64: 256, 128>}]} {
    %c0_i32 = arith.constant 0 : i32
    %0 = arith.cmpi eq, %arg1, %c0_i32 : i32
    %1 = arith.extui %0 : i1 to i32
    %c0_i32_0 = arith.constant 0 : i32
    %2 = arith.cmpi ne, %1, %c0_i32_0 : i32
    scf.if %2 {
      %cst_10 = arith.constant 0.000000e+00 : f32
      %12 = vector.broadcast %cst_10 : f32 to vector<256x128xf32>
      %c0_11 = arith.constant 0 : index
      %c0_12 = arith.constant 0 : index
      %13 = vector.load %arg6[%c0_11, %c0_12] : memref<256x128xf32, #tpu.memory_space<vmem>>, vector<256x128xf32>
      tpu.vector_store %arg6[%c0_11, %c0_12], %12 {strides = array<i32>} : memref<256x128xf32, #tpu.memory_space<vmem>>, vector<256x128xf32>,
    } else {
    }
    %c0 = arith.constant 0 : index
    %c0_1 = arith.constant 0 : index
    %3 = vector.load %arg6[%c0, %c0_1] : memref<256x128xf32, #tpu.memory_space<vmem>>, vector<256x128xf32>
    %c0_2 = arith.constant 0 : index
    %c0_3 = arith.constant 0 : index
    %4 = vector.load %arg2[%c0_2, %c0_3] : memref<256x384xbf16, #tpu.memory_space<vmem>>, vector<256x384xbf16>
    %c0_4 = arith.constant 0 : index
    %c0_5 = arith.constant 0 : index
    %5 = vector.load %arg3[%c0_4, %c0_5] : memref<384x128xbf16, #tpu.memory_space<vmem>>, vector<384x128xbf16>
    %cst = arith.constant dense<0.000000e+00> : vector<256x128xf32>
    %6 = tpu.matmul %4, %5, %cst {dimension_numbers = #tpu.dot_dimension_numbers<[1], [0], [0], [1], [0, 0, 1, 1], [], []>} : vector<256x384xbf16>, vector<384x128xbf16>, vector<256x128xf32> -> vector<256x128xf32>
    %7 = arith.addf %3, %6 : vector<256x128xf32>
    %c0_6 = arith.constant 0 : index
    %c0_7 = arith.constant 0 : index
    %8 = vector.load %arg6[%c0_6, %c0_7] : memref<256x128xf32, #tpu.memory_space<vmem>>, vector<256x128xf32>
    tpu.vector_store %arg6[%c0_6, %c0_7], %7 {strides = array<i32>} : memref<256x128xf32, #tpu.memory_space<vmem>>, vector<256x128xf32>,
    %c0_i32_8 = arith.constant 0 : i32
    %9 = arith.cmpi eq, %arg1, %c0_i32_8 : i32
    %10 = arith.extui %9 : i1 to i32
    %c0_i32_9 = arith.constant 0 : i32
    %11 = arith.cmpi ne, %10, %c0_i32_9 : i32
    scf.if %11 {
      %c0_10 = arith.constant 0 : index
      %c0_11 = arith.constant 0 : index
      %12 = vector.load %arg6[%c0_10, %c0_11] : memref<256x128xf32, #tpu.memory_space<vmem>>, vector<256x128xf32>
      %c0_12 = arith.constant 0 : index
      %c0_13 = arith.constant 0 : index
      %13 = vector.load %arg4[%c0_12, %c0_13] : memref<1x128xf32, #tpu.memory_space<vmem>>, vector<1x128xf32>
      %14 = vector.broadcast %13 : vector<1x128xf32> to vector<256x128xf32>
      %15 = arith.addf %12, %14 : vector<256x128xf32>
      %cst_14 = arith.constant 0.000000e+00 : f32
      %16 = vector.broadcast %cst_14 : f32 to vector<256x128xf32>
      %17 = arith.maximumf %15, %16 : vector<256x128xf32>
      %c0_15 = arith.constant 0 : index
      %c0_16 = arith.constant 0 : index
      %18 = vector.load %arg5[%c0_15, %c0_16] : memref<256x128xf32, #tpu.memory_space<vmem>>, vector<256x128xf32>
      tpu.vector_store %arg5[%c0_15, %c0_16], %17 {strides = array<i32>} : memref<256x128xf32, #tpu.memory_space<vmem>>, vector<256x128xf32>,
    } else {
    }
    return
  }
  func.func @transform_0(%arg0: i32, %arg1: i32) -> (i32, i32) {
    %c0_i32 = arith.constant 0 : i32
    return %arg0, %arg1 : i32, i32
  }
  func.func @transform_1(%arg0: i32, %arg1: i32) -> (i32, i32) {
    %c0_i32 = arith.constant 0 : i32
    %c0_i32_0 = arith.constant 0 : i32
    return %arg1, %c0_i32 : i32, i32
  }
  func.func @transform_2(%arg0: i32, %arg1: i32) -> (i32, i32) {
    %c0_i32 = arith.constant 0 : i32
    %c0_i32_0 = arith.constant 0 : i32
    %c0_i32_1 = arith.constant 0 : i32
    return %c0_i32, %c0_i32_0 : i32, i32
  }
  func.func @transform_3(%arg0: i32, %arg1: i32) -> (i32, i32) {
    %c0_i32 = arith.constant 0 : i32
    %c0_i32_0 = arith.constant 0 : i32
    return %arg0, %c0_i32 : i32, i32
  }
}

</mosaic_0001>

<llo_original>
// kernel: tpu_custom_call.1
$region0: #{tpu_custom_call.1}
  #allocation0 [shape = 'u32[]', space=smem, size = 0x4, offset = 0x4, fixed_abs, tag = 'smem constant byte address 0x4 - core index']
  #allocation1 [shape = 'u32[144,128]{1,0:T(1,128)}', space=vmem, size = 0x12000, scoped, tag = 'internal scratch']
  #allocation2 [shape = 'f32[256,128]{1,0:T(8,128)}', space=vmem, size = 0x20000, scoped, tag = 'scratch operand']
  %s0 = inlined_call_operand.hbm [shape: bf16[512,384], index: 0, kind: input, shape index: {}]
  %s1 = inlined_call_operand.hbm [shape: bf16[384,128], index: 1, kind: input, shape index: {}]
  %s2 = inlined_call_operand.vmem [shape: f32[1,128], index: 2, kind: input, shape index: {}]
  %s3 = inlined_call_operand.hbm [shape: f32[512,128], index: 3, kind: output, shape index: {}]
  %s4 = sld [smem:[#allocation0]]
  $region61: #{tpu_custom_call.1} parent=0
    _
  %s6 = ssub.s32 1, %s4
  %s7 = scalar_select 0, %s6, %s4
  $region1: #{tpu_custom_call.1} parent=0
    #allocation3 [shape = 'u8[393216]{0}', space=vmem, size = 0x60000, scoped, tag = 'input window, operand 0']
    #allocation4 [shape = 's32[2]{0}', space=sflag, size = 0x8, scoped, tag = 'scoped memory for tpu_custom_call.1']
    #allocation5 [shape = 's32[2]{0}', space=sflag, size = 0x8, scoped, tag = 'scoped memory for tpu_custom_call.1']
    #allocation6 [shape = 'u8[98304]{0}', space=vmem, size = 0x18000, scoped, tag = 'input window, operand 1, single buffered']
    #allocation7 [shape = 's32[1]{0}', space=sflag, size = 0x4, scoped, tag = 'scoped memory for tpu_custom_call.1']
    #allocation8 [shape = 'u8[262144]{0}', space=vmem, size = 0x40000, scoped, tag = 'output window, operand 0']
    %8 = vsyncpa [#allocation4], 0
    %s9 = scalar_lea.sflag [#allocation4], 1
    %10 = vsyncpa %s9, 0
    %11 = vsyncpa [#allocation7], 0
    %12 = vsyncpa [#allocation5], 0
    %s13 = scalar_lea.sflag [#allocation5], 1
    %14 = vsyncpa %s13, 0
    loop: start=0, step=1, limit=4
    $region2: #{tpu_custom_call.1} parent=1 // loop_pre_header
      _
    $region3: #{tpu_custom_call.1} parent=1 // loop_header
      %s16 = sphi 0, %s20
      %p17 = scmp.ge.s32.totalorder %s16, 4
      %s23 = sphi 0, %s35
      %s24 = sphi 0, %s31
      %s25 = sphi 0, %s23
      %s26 = sphi 0, %s24
      %s27 = sphi 0, %s25
      %s28 = sphi 0, %s26
      %s40 = sphi 0, %s42
      %s43 = sphi 0, %s40
      %s44 = sphi 0, %s43
      %s60 = sphi 0, %s44
      %s66 = sphi 0, %s68
      %s69 = sphi 0, %s66
      %s70 = sphi 0, %s69
      %s86 = sphi 0, %s70
      %s90 = sphi 0, %s90
      %s92 = sphi 0, %s90
      %s93 = sphi 0, %s92
      %s107 = sphi 0, %s93
      %s113 = sphi 0, %s115
      %s116 = sphi 0, %s113
      %s117 = sphi 0, %s116
      %s133 = sphi 0, %s117
    $region4: #{tpu_custom_call.1} parent=1 // loop_header_branch
      %19 = sbr.rel (%p17) target = $region8
    $region5: #{tpu_custom_call.1} parent=1 // loop_body
      %s21 = ssub.s32 %s16, 1
      %s22 = ssub.s32 %s16, 2
      %s29 = sadd.s32 1, %s24
      %p30 = scmp.ge.s32.totalorder %s29, 1
      %s31 = scalar_select %p30, 0, %s29
      %s32 = sadd.s32 1, %s23
      %s33 = scalar_select %p30, %s32, %s23
      %p34 = scmp.ge.s32.totalorder %s33, 2
      %s35 = scalar_select %p34, 0, %s33
      %s36 = ssub.s32 %s23, %s35
      %s37 = ssub.s32 %s24, %s31
      %s38 = sor.u32 %s36, %s37
      %p39 = scmp.eq.s32.totalorder %s38, 0
      %s41 = sadd.s32 %s40, 1
      %s42 = scalar_select %p39, %s40, %s41
      %p45 = pneg %p39
      %p46 = scmp.eq.s32.totalorder %s16, 1
      %p47 = por %p45, %p46
      %p48 = scmp.ne.s32.totalorder %s40, %s43
      %p49 = scmp.eq.s32.totalorder %s16, 0
      %p50 = por %p48, %p49
      %p51 = scmp.ne.s32.totalorder %s40, %s43
      %p52 = scmp.eq.s32.totalorder %s21, 1
      %p53 = por %p51, %p52
      %p54 = scmp.ne.s32.totalorder %s43, %s44
      %p55 = scmp.eq.s32.totalorder %s21, 0
      %p56 = por %p54, %p55
      %p57 = scmp.ne.s32.totalorder %s43, %s44
      %p58 = scmp.eq.s32.totalorder %s22, 1
      %p59 = por %p57, %p58
      %p61 = scmp.ne.s32.totalorder %s44, %s60
      %p62 = scmp.eq.s32.totalorder %s22, 0
      %p63 = por %p61, %p62
      %s64 = ssub.s32 %s24, %s31
      %p65 = scmp.eq.s32.totalorder %s64, 0
      %s67 = sadd.s32 %s66, 1
      %s68 = scalar_select %p65, %s66, %s67
      %p71 = pneg %p65
      %p72 = scmp.eq.s32.totalorder %s16, 1
      %p73 = por %p71, %p72
      %p74 = scmp.ne.s32.totalorder %s66, %s69
      %p75 = scmp.eq.s32.totalorder %s16, 0
      %p76 = por %p74, %p75
      %p77 = scmp.ne.s32.totalorder %s66, %s69
      %p78 = scmp.eq.s32.totalorder %s21, 1
      %p79 = por %p77, %p78
      %p80 = scmp.ne.s32.totalorder %s69, %s70
      %p81 = scmp.eq.s32.totalorder %s21, 0
      %p82 = por %p80, %p81
      %p83 = scmp.ne.s32.totalorder %s69, %s70
      %p84 = scmp.eq.s32.totalorder %s22, 1
      %p85 = por %p83, %p84
      %p87 = scmp.ne.s32.totalorder %s70, %s86
      %p88 = scmp.eq.s32.totalorder %s22, 0
      %p89 = por %p87, %p88
      %s91 = sadd.s32 %s90, 1
      %p94 = scmp.eq.s32.totalorder %s16, 1
      %p95 = scmp.ne.s32.totalorder %s90, %s92
      %p96 = scmp.eq.s32.totalorder %s16, 0
      %p97 = por %p95, %p96
      %p98 = scmp.ne.s32.totalorder %s90, %s92
      %p99 = scmp.eq.s32.totalorder %s21, 1
      %p100 = por %p98, %p99
      %p101 = scmp.ne.s32.totalorder %s92, %s93
      %p102 = scmp.eq.s32.totalorder %s21, 0
      %p103 = por %p101, %p102
      %p104 = scmp.ne.s32.totalorder %s92, %s93
      %p105 = scmp.eq.s32.totalorder %s22, 1
      %p106 = por %p104, %p105
      %p108 = scmp.ne.s32.totalorder %s93, %s107
      %p109 = scmp.eq.s32.totalorder %s22, 0
      %p110 = por %p108, %p109
      %s111 = ssub.s32 %s23, %s35
      %p112 = scmp.eq.s32.totalorder %s111, 0
      %s114 = sadd.s32 %s113, 1
      %s115 = scalar_select %p112, %s113, %s114
      %p118 = pneg %p112
      %p119 = scmp.eq.s32.totalorder %s16, 1
      %p120 = por %p118, %p119
      %p121 = scmp.ne.s32.totalorder %s113, %s116
      %p122 = scmp.eq.s32.totalorder %s16, 0
      %p123 = por %p121, %p122
      %p124 = scmp.ne.s32.totalorder %s113, %s116
      %p125 = scmp.eq.s32.totalorder %s21, 1
      %p126 = por %p124, %p125
      %p127 = scmp.ne.s32.totalorder %s116, %s117
      %p128 = scmp.eq.s32.totalorder %s21, 0
      %p129 = por %p127, %p128
      %p130 = scmp.ne.s32.totalorder %s116, %s117
      %p131 = scmp.eq.s32.totalorder %s22, 1
      %p132 = por %p130, %p131
      %p134 = scmp.ne.s32.totalorder %s117, %s133
      %p135 = scmp.eq.s32.totalorder %s22, 0
      %p136 = por %p134, %p135
      %p137 = scmp.le.s32.totalorder 1, %s16
      %p138 = scmp.lt.s32.totalorder %s16, 3
      %p139 = pnand %p137, %p138
      %p140 = pneg %p139
      // Predicated region
      $region9: #{tpu_custom_call.1} parent=5 // pred_check
        _
      $region10: #{tpu_custom_call.1} parent=5 // pred_check_branch
        %142 = sbr.rel (%p139) target = $region12
      $region11: #{tpu_custom_call.1} parent=5 // pred_region
        %s143 = ssub.s32 %s16, 1
        // Predicated region
        $region13: #{tpu_custom_call.1} parent=11 // pred_check
          %p144 = pneg %p82
        $region14: #{tpu_custom_call.1} parent=11 // pred_check_branch
          %146 = sbr.rel (%p144) target = $region16
        $region15: #{tpu_custom_call.1} parent=11 // pred_region
          %s147 = smul.u32 48, %s26
          %s149 = ssub.s32 3072, 3072
          %150 = vsyncadd [#allocation7], %s149
          %s151 = smul.addr %s147, 64
          %s152 = scalar_lea.hbm %s1, %s151
          %s153 = sshll.u32 [#allocation6], 4
          %s154 = int_to_ptr.vmem [resolvable:$true] %s153
          %159 = dma.hbm_to_vmem [thread:$0]  %s152, 3072, %s154, [#allocation7], 64, 64, 4
        $region16: #{tpu_custom_call.1} parent=11 // pred_fallthru
          _
        // Predicated region
        $region17: #{tpu_custom_call.1} parent=11 // pred_check
          %p160 = pneg %p103
        $region18: #{tpu_custom_call.1} parent=11 // pred_check_branch
          %162 = sbr.rel (%p160) target = $region20
        $region19: #{tpu_custom_call.1} parent=11 // pred_region
          _
        $region20: #{tpu_custom_call.1} parent=11 // pred_fallthru
          _
      $region12: #{tpu_custom_call.1} parent=5 // pred_fallthru
        _
      %p163 = scmp.lt.s32.totalorder %s16, 2
      // Predicated region
      $region21: #{tpu_custom_call.1} parent=5 // pred_check
        %p164 = pneg %p163
      $region22: #{tpu_custom_call.1} parent=5 // pred_check_branch
        %166 = sbr.rel (%p164) target = $region24
      $region23: #{tpu_custom_call.1} parent=5 // pred_region
        // Predicated region
        $region25: #{tpu_custom_call.1} parent=23 // pred_check
          %p167 = pneg %p50
        $region26: #{tpu_custom_call.1} parent=23 // pred_check_branch
          %169 = sbr.rel (%p167) target = $region28
        $region27: #{tpu_custom_call.1} parent=23 // pred_region
          %s170 = sand.u32 %s40, 1
          %s171 = scalar_lea.sflag [#allocation4], %s170
          %s172 = sand.u32 %s40, 1
          %s173 = smul.addr %s172, 384
          %s174 = scalar_lea.vmem [#allocation3], %s173
          %s175 = smul.u32 32, %s23
          %s176 = smul.u32 3, %s24
          %s178 = ssub.s32 6144, 6144
          %179 = vsyncadd %s171, %s178
          %s180 = smul.addr %s175, 3
          %s181 = sadd.s32 %s176, %s180
          %s182 = smul.addr %s181, 64
          %s183 = scalar_lea.hbm %s0, %s182
          %s184 = sshll.u32 %s174, 4
          %s185 = int_to_ptr.vmem [resolvable:$true] %s184
          %190 = dma.hbm_to_vmem [thread:$0]  %s183, 6144, %s185, %s171, 192, 192, 12
        $region28: #{tpu_custom_call.1} parent=23 // pred_fallthru
          _
      $region24: #{tpu_custom_call.1} parent=5 // pred_fallthru
        _
      %p191 = scmp.le.s32.totalorder 1, %s16
      %p192 = scmp.lt.s32.totalorder %s16, 3
      %p193 = pnand %p191, %p192
      %p194 = pneg %p193
      // Predicated region
      $region29: #{tpu_custom_call.1} parent=5 // pred_check
        _
      $region30: #{tpu_custom_call.1} parent=5 // pred_check_branch
        %196 = sbr.rel (%p193) target = $region32
      $region31: #{tpu_custom_call.1} parent=5 // pred_region
        %s197 = ssub.s32 %s16, 1
        %s198 = sand.u32 %s43, 1
        %s199 = scalar_lea.sflag [#allocation4], %s198
        %s200 = sand.u32 %s43, 1
        %s201 = smul.addr %s200, 384
        %s202 = scalar_lea.vmem [#allocation3], %s201
        // Predicated region
        $region33: #{tpu_custom_call.1} parent=31 // pred_check
          %p203 = pneg %p56
        $region34: #{tpu_custom_call.1} parent=31 // pred_check_branch
          %205 = sbr.rel (%p203) target = $region36
        $region35: #{tpu_custom_call.1} parent=31 // pred_region
          %206 = dma.done %s199, 6144
        $region36: #{tpu_custom_call.1} parent=31 // pred_fallthru
          _
        // Predicated region
        $region37: #{tpu_custom_call.1} parent=31 // pred_check
          %p207 = pneg %p82
        $region38: #{tpu_custom_call.1} parent=31 // pred_check_branch
          %209 = sbr.rel (%p207) target = $region40
        $region39: #{tpu_custom_call.1} parent=31 // pred_region
          %210 = dma.done [#allocation7], 3072
        $region40: #{tpu_custom_call.1} parent=31 // pred_fallthru
          _
        %s211 = sand.u32 %s43, 1
        %s212 = scalar_lea.sflag [#allocation4], %s211
        %s213 = sand.u32 %s43, 1
        %s214 = smul.addr %s213, 384
        %s215 = scalar_lea.vmem [#allocation3], %s214
        %p216 = pneg %p56
        %p217 = pneg %p53
        %p218 = pneg %p82
        %p219 = pneg %p79
        %p220 = pneg %p103
        %p221 = pneg %p100
        %p222 = pneg %p129
        %p223 = pneg %p126
        %s224 = sand.u32 %s116, 1
        %s225 = scalar_lea.sflag [#allocation5], %s224
        %s226 = sand.u32 %s116, 1
        %s227 = smul.addr %s226, 256
        %s228 = scalar_lea.vmem [#allocation8], %s227
        %s229 = smul.u32 32, %s25
        %s230 = smul.u32 3, %s26
        %s231 = smul.u32 48, %s26
        %s232 = smul.u32 32, %s25
        %p234 = scmp.eq.s32.totalorder %s26, 0
        // Predicated region
        $region41: #{tpu_custom_call.1} parent=31 // pred_check
          %p235 = pneg %p234
        $region42: #{tpu_custom_call.1} parent=31 // pred_check_branch
          %237 = sbr.rel (%p235) target = $region44
        $region43: #{tpu_custom_call.1} parent=31 // pred_region
          %238 = vst [vmem:[#allocation2] sm:$0xff] 0.0
          %239 = vst [vmem:[#allocation2 + $0x8] sm:$0xff] 0.0
          %240 = vst [vmem:[#allocation2 + $0x10] sm:$0xff] 0.0
          %241 = vst [vmem:[#allocation2 + $0x18] sm:$0xff] 0.0
          %242 = vst [vmem:[#allocation2 + $0x20] sm:$0xff] 0.0
          %243 = vst [vmem:[#allocation2 + $0x28] sm:$0xff] 0.0
          %244 = vst [vmem:[#allocation2 + $0x30] sm:$0xff] 0.0
          %245 = vst [vmem:[#allocation2 + $0x38] sm:$0xff] 0.0
          %246 = vst [vmem:[#allocation2 + $0x40] sm:$0xff] 0.0
          %247 = vst [vmem:[#allocation2 + $0x48] sm:$0xff] 0.0
          %248 = vst [vmem:[#allocation2 + $0x50] sm:$0xff] 0.0
          %249 = vst [vmem:[#allocation2 + $0x58] sm:$0xff] 0.0
          %250 = vst [vmem:[#allocation2 + $0x60] sm:$0xff] 0.0
          %251 = vst [vmem:[#allocation2 + $0x68] sm:$0xff] 0.0
          %252 = vst [vmem:[#allocation2 + $0x70] sm:$0xff] 0.0
          %253 = vst [vmem:[#allocation2 + $0x78] sm:$0xff] 0.0
          %254 = vst [vmem:[#allocation2 + $0x80] sm:$0xff] 0.0
          %255 = vst [vmem:[#allocation2 + $0x88] sm:$0xff] 0.0
          %256 = vst [vmem:[#allocation2 + $0x90] sm:$0xff] 0.0
          %257 = vst [vmem:[#allocation2 + $0x98] sm:$0xff] 0.0
          %258 = vst [vmem:[#allocation2 + $0xa0] sm:$0xff] 0.0
          %259 = vst [vmem:[#allocation2 + $0xa8] sm:$0xff] 0.0
          %260 = vst [vmem:[#allocation2 + $0xb0] sm:$0xff] 0.0
          %261 = vst [vmem:[#allocation2 + $0xb8] sm:$0xff] 0.0
          %262 = vst [vmem:[#allocation2 + $0xc0] sm:$0xff] 0.0
          %263 = vst [vmem:[#allocation2 + $0xc8] sm:$0xff] 0.0
          %264 = vst [vmem:[#allocation2 + $0xd0] sm:$0xff] 0.0
          %265 = vst [vmem:[#allocation2 + $0xd8] sm:$0xff] 0.0
          %266 = vst [vmem:[#allocation2 + $0xe0] sm:$0xff] 0.0
          %267 = vst [vmem:[#allocation2 + $0xe8] sm:$0xff] 0.0
          %268 = vst [vmem:[#allocation2 + $0xf0] sm:$0xff] 0.0
          %269 = vst [vmem:[#allocation2 + $0xf8] sm:$0xff] 0.0
        $region44: #{tpu_custom_call.1} parent=31 // pred_fallthru
          _
        %v270 = vld [vmem:[#allocation2] sm:$0xff]
        %v271 = vld [vmem:[#allocation2 + $0x8] sm:$0xff]
        %v272 = vld [vmem:[#allocation2 + $0x10] sm:$0xff]
        %v273 = vld [vmem:[#allocation2 + $0x18] sm:$0xff]
        %v274 = vld [vmem:[#allocation2 + $0x20] sm:$0xff]
        %v275 = vld [vmem:[#allocation2 + $0x28] sm:$0xff]
        %v276 = vld [vmem:[#allocation2 + $0x30] sm:$0xff]
        %v277 = vld [vmem:[#allocation2 + $0x38] sm:$0xff]
        %v278 = vld [vmem:[#allocation2 + $0x40] sm:$0xff]
        %v279 = vld [vmem:[#allocation2 + $0x48] sm:$0xff]
        %v280 = vld [vmem:[#allocation2 + $0x50] sm:$0xff]
        %v281 = vld [vmem:[#allocation2 + $0x58] sm:$0xff]
        %v282 = vld [vmem:[#allocation2 + $0x60] sm:$0xff]
        %v283 = vld [vmem:[#allocation2 + $0x68] sm:$0xff]
        %v284 = vld [vmem:[#allocation2 + $0x70] sm:$0xff]
        %v285 = vld [vmem:[#allocation2 + $0x78] sm:$0xff]
        %v286 = vld [vmem:[#allocation2 + $0x80] sm:$0xff]
        %v287 = vld [vmem:[#allocation2 + $0x88] sm:$0xff]
        %v288 = vld [vmem:[#allocation2 + $0x90] sm:$0xff]
        %v289 = vld [vmem:[#allocation2 + $0x98] sm:$0xff]
        %v290 = vld [vmem:[#allocation2 + $0xa0] sm:$0xff]
        %v291 = vld [vmem:[#allocation2 + $0xa8] sm:$0xff]
        %v292 = vld [vmem:[#allocation2 + $0xb0] sm:$0xff]
        %v293 = vld [vmem:[#allocation2 + $0xb8] sm:$0xff]
        %v294 = vld [vmem:[#allocation2 + $0xc0] sm:$0xff]
        %v295 = vld [vmem:[#allocation2 + $0xc8] sm:$0xff]
        %v296 = vld [vmem:[#allocation2 + $0xd0] sm:$0xff]
        %v297 = vld [vmem:[#allocation2 + $0xd8] sm:$0xff]
        %v298 = vld [vmem:[#allocation2 + $0xe0] sm:$0xff]
        %v299 = vld [vmem:[#allocation2 + $0xe8] sm:$0xff]
        %v300 = vld [vmem:[#allocation2 + $0xf0] sm:$0xff]
        %v301 = vld [vmem:[#allocation2 + $0xf8] sm:$0xff]
        %v302 = vld [vmem:[%s202] sm:$0xff]
        %v303 = vld [vmem:[%s202 + $0x8] sm:$0xf]
        %v304 = vld [vmem:[%s202 + $0xc] sm:$0xff]
        %v305 = vld [vmem:[%s202 + $0x14] sm:$0xf]
        %v306 = vld [vmem:[%s202 + $0x18] sm:$0xff]
        %v307 = vld [vmem:[%s202 + $0x20] sm:$0xf]
        %v308 = vld [vmem:[%s202 + $0x24] sm:$0xff]
        %v309 = vld [vmem:[%s202 + $0x2c] sm:$0xf]
        %v310 = vld [vmem:[%s202 + $0x30] sm:$0xff]
        %v311 = vld [vmem:[%s202 + $0x38] sm:$0xf]
        %v312 = vld [vmem:[%s202 + $0x3c] sm:$0xff]
        %v313 = vld [vmem:[%s202 + $0x44] sm:$0xf]
        %v314 = vld [vmem:[%s202 + $0x48] sm:$0xff]
        %v315 = vld [vmem:[%s202 + $0x50] sm:$0xf]
        %v316 = vld [vmem:[%s202 + $0x54] sm:$0xff]
        %v317 = vld [vmem:[%s202 + $0x5c] sm:$0xf]
        %v318 = vld [vmem:[%s202 + $0x60] sm:$0xff]
        %v319 = vld [vmem:[%s202 + $0x68] sm:$0xf]
        %v320 = vld [vmem:[%s202 + $0x6c] sm:$0xff]
        %v321 = vld [vmem:[%s202 + $0x74] sm:$0xf]
        %v322 = vld [vmem:[%s202 + $0x78] sm:$0xff]
        %v323 = vld [vmem:[%s202 + $0x80] sm:$0xf]
        %v324 = vld [vmem:[%s202 + $0x84] sm:$0xff]
        %v325 = vld [vmem:[%s202 + $0x8c] sm:$0xf]
        %v326 = vld [vmem:[%s202 + $0x90] sm:$0xff]
        %v327 = vld [vmem:[%s202 + $0x98] sm:$0xf]
        %v328 = vld [vmem:[%s202 + $0x9c] sm:$0xff]
        %v329 = vld [vmem:[%s202 + $0xa4] sm:$0xf]
        %v330 = vld [vmem:[%s202 + $0xa8] sm:$0xff]
        %v331 = vld [vmem:[%s202 + $0xb0] sm:$0xf]
        %v332 = vld [vmem:[%s202 + $0xb4] sm:$0xff]
        %v333 = vld [vmem:[%s202 + $0xbc] sm:$0xf]
        %v334 = vld [vmem:[%s202 + $0xc0] sm:$0xff]
        %v335 = vld [vmem:[%s202 + $0xc8] sm:$0xf]
        %v336 = vld [vmem:[%s202 + $0xcc] sm:$0xff]
        %v337 = vld [vmem:[%s202 + $0xd4] sm:$0xf]
        %v338 = vld [vmem:[%s202 + $0xd8] sm:$0xff]
        %v339 = vld [vmem:[%s202 + $0xe0] sm:$0xf]
        %v340 = vld [vmem:[%s202 + $0xe4] sm:$0xff]
        %v341 = vld [vmem:[%s202 + $0xec] sm:$0xf]
        %v342 = vld [vmem:[%s202 + $0xf0] sm:$0xff]
        %v343 = vld [vmem:[%s202 + $0xf8] sm:$0xf]
        %v344 = vld [vmem:[%s202 + $0xfc] sm:$0xff]
        %v345 = vld [vmem:[%s202 + $0x104] sm:$0xf]
        %v346 = vld [vmem:[%s202 + $0x108] sm:$0xff]
        %v347 = vld [vmem:[%s202 + $0x110] sm:$0xf]
        %v348 = vld [vmem:[%s202 + $0x114] sm:$0xff]
        %v349 = vld [vmem:[%s202 + $0x11c] sm:$0xf]
        %v350 = vld [vmem:[%s202 + $0x120] sm:$0xff]
        %v351 = vld [vmem:[%s202 + $0x128] sm:$0xf]
        %v352 = vld [vmem:[%s202 + $0x12c] sm:$0xff]
        %v353 = vld [vmem:[%s202 + $0x134] sm:$0xf]
        %v354 = vld [vmem:[%s202 + $0x138] sm:$0xff]
        %v355 = vld [vmem:[%s202 + $0x140] sm:$0xf]
        %v356 = vld [vmem:[%s202 + $0x144] sm:$0xff]
        %v357 = vld [vmem:[%s202 + $0x14c] sm:$0xf]
        %v358 = vld [vmem:[%s202 + $0x150] sm:$0xff]
        %v359 = vld [vmem:[%s202 + $0x158] sm:$0xf]
        %v360 = vld [vmem:[%s202 + $0x15c] sm:$0xff]
        %v361 = vld [vmem:[%s202 + $0x164] sm:$0xf]
        %v362 = vld [vmem:[%s202 + $0x168] sm:$0xff]
        %v363 = vld [vmem:[%s202 + $0x170] sm:$0xf]
        %v364 = vld [vmem:[%s202 + $0x174] sm:$0xff]
        %v365 = vld [vmem:[%s202 + $0x17c] sm:$0xf]
        %v366 = vld [vmem:[#allocation6] sm:$0xf]
        %v367 = vld [vmem:[#allocation6 + $0x4] sm:$0xf]
        %v368 = vld [vmem:[#allocation6 + $0x8] sm:$0xf]
        %v369 = vld [vmem:[#allocation6 + $0xc] sm:$0xf]
        %v370 = vld [vmem:[#allocation6 + $0x10] sm:$0xf]
        %v371 = vld [vmem:[#allocation6 + $0x14] sm:$0xf]
        %v372 = vld [vmem:[#allocation6 + $0x18] sm:$0xf]
        %v373 = vld [vmem:[#allocation6 + $0x1c] sm:$0xf]
        %v374 = vld [vmem:[#allocation6 + $0x20] sm:$0xf]
        %v375 = vld [vmem:[#allocation6 + $0x24] sm:$0xf]
        %v376 = vld [vmem:[#allocation6 + $0x28] sm:$0xf]
        %v377 = vld [vmem:[#allocation6 + $0x2c] sm:$0xf]
        %v378 = vld [vmem:[#allocation6 + $0x30] sm:$0xf]
        %v379 = vld [vmem:[#allocation6 + $0x34] sm:$0xf]
        %v380 = vld [vmem:[#allocation6 + $0x38] sm:$0xf]
        %v381 = vld [vmem:[#allocation6 + $0x3c] sm:$0xf]
        %v382 = vld [vmem:[#allocation6 + $0x40] sm:$0xf]
        %v383 = vld [vmem:[#allocation6 + $0x44] sm:$0xf]
        %v384 = vld [vmem:[#allocation6 + $0x48] sm:$0xf]
        %v385 = vld [vmem:[#allocation6 + $0x4c] sm:$0xf]
        %v386 = vld [vmem:[#allocation6 + $0x50] sm:$0xf]
        %v387 = vld [vmem:[#allocation6 + $0x54] sm:$0xf]
        %v388 = vld [vmem:[#allocation6 + $0x58] sm:$0xf]
        %v389 = vld [vmem:[#allocation6 + $0x5c] sm:$0xf]
        %v390 = vld [vmem:[#allocation6 + $0x60] sm:$0xf]
        %v391 = vld [vmem:[#allocation6 + $0x64] sm:$0xf]
        %v392 = vld [vmem:[#allocation6 + $0x68] sm:$0xf]
        %v393 = vld [vmem:[#allocation6 + $0x6c] sm:$0xf]
        %v394 = vld [vmem:[#allocation6 + $0x70] sm:$0xf]
        %v395 = vld [vmem:[#allocation6 + $0x74] sm:$0xf]
        %v396 = vld [vmem:[#allocation6 + $0x78] sm:$0xf]
        %v397 = vld [vmem:[#allocation6 + $0x7c] sm:$0xf]
        %v398 = vld [vmem:[#allocation6 + $0x80] sm:$0xf]
        %v399 = vld [vmem:[#allocation6 + $0x84] sm:$0xf]
        %v400 = vld [vmem:[#allocation6 + $0x88] sm:$0xf]
        %v401 = vld [vmem:[#allocation6 + $0x8c] sm:$0xf]
        %v402 = vld [vmem:[#allocation6 + $0x90] sm:$0xf]
        %v403 = vld [vmem:[#allocation6 + $0x94] sm:$0xf]
        %v404 = vld [vmem:[#allocation6 + $0x98] sm:$0xf]
        %v405 = vld [vmem:[#allocation6 + $0x9c] sm:$0xf]
        %v406 = vld [vmem:[#allocation6 + $0xa0] sm:$0xf]
        %v407 = vld [vmem:[#allocation6 + $0xa4] sm:$0xf]
        %v408 = vld [vmem:[#allocation6 + $0xa8] sm:$0xf]
        %v409 = vld [vmem:[#allocation6 + $0xac] sm:$0xf]
        %v410 = vld [vmem:[#allocation6 + $0xb0] sm:$0xf]
        %v411 = vld [vmem:[#allocation6 + $0xb4] sm:$0xf]
        %v412 = vld [vmem:[#allocation6 + $0xb8] sm:$0xf]
        %v413 = vld [vmem:[#allocation6 + $0xbc] sm:$0xf]
        %v478 = vunpack.c.l.b16 %v302
        %v479 = vunpack.c.h.b16 %v302
        %v480 = vunpack.c.l.b16 %v303
        %v481 = vunpack.c.l.b16 %v304
        %v482 = vunpack.c.h.b16 %v304
        %v483 = vunpack.c.l.b16 %v305
        %v484 = vunpack.c.l.b16 %v306
        %v485 = vunpack.c.h.b16 %v306
        %v486 = vunpack.c.l.b16 %v307
        %v487 = vunpack.c.l.b16 %v308
        %v488 = vunpack.c.h.b16 %v308
        %v489 = vunpack.c.l.b16 %v309
        %v490 = vunpack.c.l.b16 %v310
        %v491 = vunpack.c.h.b16 %v310
        %v492 = vunpack.c.l.b16 %v311
        %v493 = vunpack.c.l.b16 %v312
        %v494 = vunpack.c.h.b16 %v312
        %v495 = vunpack.c.l.b16 %v313
        %v496 = vunpack.c.l.b16 %v314
        %v497 = vunpack.c.h.b16 %v314
        %v498 = vunpack.c.l.b16 %v315
        %v499 = vunpack.c.l.b16 %v316
        %v500 = vunpack.c.h.b16 %v316
        %v501 = vunpack.c.l.b16 %v317
        %v502 = vunpack.c.l.b16 %v318
        %v503 = vunpack.c.h.b16 %v318
        %v504 = vunpack.c.l.b16 %v319
        %v505 = vunpack.c.l.b16 %v320
        %v506 = vunpack.c.h.b16 %v320
        %v507 = vunpack.c.l.b16 %v321
        %v508 = vunpack.c.l.b16 %v322
        %v509 = vunpack.c.h.b16 %v322
        %v510 = vunpack.c.l.b16 %v323
        %v511 = vunpack.c.l.b16 %v324
        %v512 = vunpack.c.h.b16 %v324
        %v513 = vunpack.c.l.b16 %v325
        %v514 = vunpack.c.l.b16 %v326
        %v515 = vunpack.c.h.b16 %v326
        %v516 = vunpack.c.l.b16 %v327
        %v517 = vunpack.c.l.b16 %v328
        %v518 = vunpack.c.h.b16 %v328
        %v519 = vunpack.c.l.b16 %v329
        %v520 = vunpack.c.l.b16 %v330
        %v521 = vunpack.c.h.b16 %v330
        %v522 = vunpack.c.l.b16 %v331
        %v523 = vunpack.c.l.b16 %v332
        %v524 = vunpack.c.h.b16 %v332
        %v525 = vunpack.c.l.b16 %v333
        %v526 = vunpack.c.l.b16 %v334
        %v527 = vunpack.c.h.b16 %v334
        %v528 = vunpack.c.l.b16 %v335
        %v529 = vunpack.c.l.b16 %v336
        %v530 = vunpack.c.h.b16 %v336
        %v531 = vunpack.c.l.b16 %v337
        %v532 = vunpack.c.l.b16 %v338
        %v533 = vunpack.c.h.b16 %v338
        %v534 = vunpack.c.l.b16 %v339
        %v535 = vunpack.c.l.b16 %v340
        %v536 = vunpack.c.h.b16 %v340
        %v537 = vunpack.c.l.b16 %v341
        %v538 = vunpack.c.l.b16 %v342
        %v539 = vunpack.c.h.b16 %v342
        %v540 = vunpack.c.l.b16 %v343
        %v541 = vunpack.c.l.b16 %v344
        %v542 = vunpack.c.h.b16 %v344
        %v543 = vunpack.c.l.b16 %v345
        %v544 = vunpack.c.l.b16 %v346
        %v545 = vunpack.c.h.b16 %v346
        %v546 = vunpack.c.l.b16 %v347
        %v547 = vunpack.c.l.b16 %v348
        %v548 = vunpack.c.h.b16 %v348
        %v549 = vunpack.c.l.b16 %v349
        %v550 = vunpack.c.l.b16 %v350
        %v551 = vunpack.c.h.b16 %v350
        %v552 = vunpack.c.l.b16 %v351
        %v553 = vunpack.c.l.b16 %v352
        %v554 = vunpack.c.h.b16 %v352
        %v555 = vunpack.c.l.b16 %v353
        %v556 = vunpack.c.l.b16 %v354
        %v557 = vunpack.c.h.b16 %v354
        %v558 = vunpack.c.l.b16 %v355
        %v559 = vunpack.c.l.b16 %v356
        %v560 = vunpack.c.h.b16 %v356
        %v561 = vunpack.c.l.b16 %v357
        %v562 = vunpack.c.l.b16 %v358
        %v563 = vunpack.c.h.b16 %v358
        %v564 = vunpack.c.l.b16 %v359
        %v565 = vunpack.c.l.b16 %v360
        %v566 = vunpack.c.h.b16 %v360
        %v567 = vunpack.c.l.b16 %v361
        %v568 = vunpack.c.l.b16 %v362
        %v569 = vunpack.c.h.b16 %v362
        %v570 = vunpack.c.l.b16 %v363
        %v571 = vunpack.c.l.b16 %v364
        %v572 = vunpack.c.h.b16 %v364
        %v573 = vunpack.c.l.b16 %v365
        %v574 = vpack.c.b16 %v481, %v478
        %v575 = vpack.c.b16 %v482, %v479
        %v576 = vpack.c.b16 %v483, %v480
        %v577 = vpack.c.b16 %v487, %v484
        %v578 = vpack.c.b16 %v488, %v485
        %v579 = vpack.c.b16 %v489, %v486
        %v580 = vpack.c.b16 %v493, %v490
        %v581 = vpack.c.b16 %v494, %v491
        %v582 = vpack.c.b16 %v495, %v492
        %v583 = vpack.c.b16 %v499, %v496
        %v584 = vpack.c.b16 %v500, %v497
        %v585 = vpack.c.b16 %v501, %v498
        %v586 = vpack.c.b16 %v505, %v502
        %v587 = vpack.c.b16 %v506, %v503
        %v588 = vpack.c.b16 %v507, %v504
        %v589 = vpack.c.b16 %v511, %v508
        %v590 = vpack.c.b16 %v512, %v509
        %v591 = vpack.c.b16 %v513, %v510
        %v592 = vpack.c.b16 %v517, %v514
        %v593 = vpack.c.b16 %v518, %v515
        %v594 = vpack.c.b16 %v519, %v516
        %v595 = vpack.c.b16 %v523, %v520
        %v596 = vpack.c.b16 %v524, %v521
        %v597 = vpack.c.b16 %v525, %v522
        %v598 = vpack.c.b16 %v529, %v526
        %v599 = vpack.c.b16 %v530, %v527
        %v600 = vpack.c.b16 %v531, %v528
        %v601 = vpack.c.b16 %v535, %v532
        %v602 = vpack.c.b16 %v536, %v533
        %v603 = vpack.c.b16 %v537, %v534
        %v604 = vpack.c.b16 %v541, %v538
        %v605 = vpack.c.b16 %v542, %v539
        %v606 = vpack.c.b16 %v543, %v540
        %v607 = vpack.c.b16 %v547, %v544
        %v608 = vpack.c.b16 %v548, %v545
        %v609 = vpack.c.b16 %v549, %v546
        %v610 = vpack.c.b16 %v553, %v550
        %v611 = vpack.c.b16 %v554, %v551
        %v612 = vpack.c.b16 %v555, %v552
        %v613 = vpack.c.b16 %v559, %v556
        %v614 = vpack.c.b16 %v560, %v557
        %v615 = vpack.c.b16 %v561, %v558
        %v616 = vpack.c.b16 %v565, %v562
        %v617 = vpack.c.b16 %v566, %v563
        %v618 = vpack.c.b16 %v567, %v564
        %v619 = vpack.c.b16 %v571, %v568
        %v620 = vpack.c.b16 %v572, %v569
        %v621 = vpack.c.b16 %v573, %v570
        %v718 = vunpack.c.l.b16 %v366
        %v719 = vunpack.c.l.b16 %v367
        %v720 = vunpack.c.l.b16 %v368
        %v721 = vunpack.c.l.b16 %v369
        %v722 = vunpack.c.l.b16 %v370
        %v723 = vunpack.c.l.b16 %v371
        %v724 = vunpack.c.l.b16 %v372
        %v725 = vunpack.c.l.b16 %v373
        %v726 = vunpack.c.l.b16 %v374
        %v727 = vunpack.c.l.b16 %v375
        %v728 = vunpack.c.l.b16 %v376
        %v729 = vunpack.c.l.b16 %v377
        %v730 = vunpack.c.l.b16 %v378
        %v731 = vunpack.c.l.b16 %v379
        %v732 = vunpack.c.l.b16 %v380
        %v733 = vunpack.c.l.b16 %v381
        %v734 = vunpack.c.l.b16 %v382
        %v735 = vunpack.c.l.b16 %v383
        %v736 = vunpack.c.l.b16 %v384
        %v737 = vunpack.c.l.b16 %v385
        %v738 = vunpack.c.l.b16 %v386
        %v739 = vunpack.c.l.b16 %v387
        %v740 = vunpack.c.l.b16 %v388
        %v741 = vunpack.c.l.b16 %v389
        %v742 = vunpack.c.l.b16 %v390
        %v743 = vunpack.c.l.b16 %v391
        %v744 = vunpack.c.l.b16 %v392
        %v745 = vunpack.c.l.b16 %v393
        %v746 = vunpack.c.l.b16 %v394
        %v747 = vunpack.c.l.b16 %v395
        %v748 = vunpack.c.l.b16 %v396
        %v749 = vunpack.c.l.b16 %v397
        %v750 = vunpack.c.l.b16 %v398
        %v751 = vunpack.c.l.b16 %v399
        %v752 = vunpack.c.l.b16 %v400
        %v753 = vunpack.c.l.b16 %v401
        %v754 = vunpack.c.l.b16 %v402
        %v755 = vunpack.c.l.b16 %v403
        %v756 = vunpack.c.l.b16 %v404
        %v757 = vunpack.c.l.b16 %v405
        %v758 = vunpack.c.l.b16 %v406
        %v759 = vunpack.c.l.b16 %v407
        %v760 = vunpack.c.l.b16 %v408
        %v761 = vunpack.c.l.b16 %v409
        %v762 = vunpack.c.l.b16 %v410
        %v763 = vunpack.c.l.b16 %v411
        %v764 = vunpack.c.l.b16 %v412
        %v765 = vunpack.c.l.b16 %v413
        %v766 = vpack.c.b16 %v719, %v718
        %v767 = vpack.c.b16 %v721, %v720
        %v768 = vpack.c.b16 %v723, %v722
        %v769 = vpack.c.b16 %v725, %v724
        %v770 = vpack.c.b16 %v727, %v726
        %v771 = vpack.c.b16 %v729, %v728
        %v772 = vpack.c.b16 %v731, %v730
        %v773 = vpack.c.b16 %v733, %v732
        %v774 = vpack.c.b16 %v735, %v734
        %v775 = vpack.c.b16 %v737, %v736
        %v776 = vpack.c.b16 %v739, %v738
        %v777 = vpack.c.b16 %v741, %v740
        %v778 = vpack.c.b16 %v743, %v742
        %v779 = vpack.c.b16 %v745, %v744
        %v780 = vpack.c.b16 %v747, %v746
        %v781 = vpack.c.b16 %v749, %v748
        %v782 = vpack.c.b16 %v751, %v750
        %v783 = vpack.c.b16 %v753, %v752
        %v784 = vpack.c.b16 %v755, %v754
        %v785 = vpack.c.b16 %v757, %v756
        %v786 = vpack.c.b16 %v759, %v758
        %v787 = vpack.c.b16 %v761, %v760
        %v788 = vpack.c.b16 %v763, %v762
        %v789 = vpack.c.b16 %v765, %v764
        %814 = vmatprep.subr.bf16.mxu0 0
        %815 = vmatpush1.bf16.msra.mxu0 %v766
        %816 = vmatprep.subr.bf16.mxu0 0
        %817 = vmatpush1.bf16.msra.mxu0 %v767
        %818 = vmatprep.subr.bf16.mxu0 0
        %819 = vmatpush1.bf16.msra.mxu0 %v768
        %820 = vmatprep.subr.bf16.mxu0 0
        %821 = vmatpush1.bf16.msra.mxu0 %v769
        %822 = vmatprep.subr.bf16.mxu0 0
        %823 = vmatpush1.bf16.msra.mxu0 %v770
        %824 = vmatprep.subr.bf16.mxu0 0
        %825 = vmatpush1.bf16.msra.mxu0 %v771
        %826 = vmatprep.subr.bf16.mxu0 0
        %827 = vmatpush1.bf16.msra.mxu0 %v772
        %828 = vmatprep.subr.bf16.mxu0 0
        %829 = vmatpush1.bf16.msra.mxu0 %v773
        %830 = vmatprep.subr.bf16.mxu0 0
        %831 = vmatpush1.bf16.msra.mxu0 %v774
        %832 = vmatprep.subr.bf16.mxu0 0
        %833 = vmatpush1.bf16.msra.mxu0 %v775
        %834 = vmatprep.subr.bf16.mxu0 0
        %835 = vmatpush1.bf16.msra.mxu0 %v776
        %836 = vmatprep.subr.bf16.mxu0 0
        %837 = vmatpush1.bf16.msra.mxu0 %v777
        %838 = vmatprep.subr.bf16.mxu0 0
        %839 = vmatpush1.bf16.msra.mxu0 %v778
        %840 = vmatprep.subr.bf16.mxu0 0
        %841 = vmatpush1.bf16.msra.mxu0 %v779
        %842 = vmatprep.subr.bf16.mxu0 0
        %843 = vmatpush1.bf16.msra.mxu0 %v780
        %844 = vmatprep.subr.bf16.mxu0 0
        %845 = vmatpush1.bf16.msra.mxu0 %v781
        %846 = vmatprep.mubr.bf16.mxu0 %v575
        %847 = vmatmul.mubr.bf16.gmra.mrb[0].mxu0 %v574
        %v848 = vpop.f32.mrb[0].mxu0
        %v849 = vadd.f32 0.0, %v848
        %v850 = vpop.f32.mrb[0].mxu0
        %v851 = vpop.f32.mrb[0].mxu0
        %v852 = vadd.f32 0.0, %v851
        %v853 = vpop.f32.mrb[0].mxu0
        %854 = vmatprep.mubr.bf16.mxu0 %v578
        %855 = vmatmul.mubr.bf16.gmra.mrb[0].mxu0 %v577
        %v856 = vpop.f32.mrb[0].mxu0
        %v857 = vadd.f32 0.0, %v856
        %v858 = vpop.f32.mrb[0].mxu0
        %v859 = vpop.f32.mrb[0].mxu0
        %v860 = vadd.f32 0.0, %v859
        %v861 = vpop.f32.mrb[0].mxu0
        %862 = vmatprep.mubr.bf16.mxu0 %v581
        %863 = vmatmul.mubr.bf16.gmra.mrb[0].mxu0 %v580
        %v864 = vpop.f32.mrb[0].mxu0
        %v865 = vadd.f32 0.0, %v864
        %v866 = vpop.f32.mrb[0].mxu0
        %v867 = vpop.f32.mrb[0].mxu0
        %v868 = vadd.f32 0.0, %v867
        %v869 = vpop.f32.mrb[0].mxu0
        %870 = vmatprep.mubr.bf16.mxu0 %v584
        %871 = vmatmul.mubr.bf16.gmra.mrb[0].mxu0 %v583
        %v872 = vpop.f32.mrb[0].mxu0
        %v873 = vadd.f32 0.0, %v872
        %v874 = vpop.f32.mrb[0].mxu0
        %v875 = vpop.f32.mrb[0].mxu0
        %v876 = vadd.f32 0.0, %v875
        %v877 = vpop.f32.mrb[0].mxu0
        %878 = vmatprep.mubr.bf16.mxu0 %v587
        %879 = vmatmul.mubr.bf16.gmra.mrb[0].mxu0 %v586
        %v880 = vpop.f32.mrb[0].mxu0
        %v881 = vadd.f32 0.0, %v880
        %v882 = vpop.f32.mrb[0].mxu0
        %v883 = vpop.f32.mrb[0].mxu0
        %v884 = vadd.f32 0.0, %v883
        %v885 = vpop.f32.mrb[0].mxu0
        %886 = vmatprep.mubr.bf16.mxu0 %v590
        %887 = vmatmul.mubr.bf16.gmra.mrb[0].mxu0 %v589
        %v888 = vpop.f32.mrb[0].mxu0
        %v889 = vadd.f32 0.0, %v888
        %v890 = vpop.f32.mrb[0].mxu0
        %v891 = vpop.f32.mrb[0].mxu0
        %v892 = vadd.f32 0.0, %v891
        %v893 = vpop.f32.mrb[0].mxu0
        %894 = vmatprep.mubr.bf16.mxu0 %v593
        %895 = vmatmul.mubr.bf16.gmra.mrb[0].mxu0 %v592
        %v896 = vpop.f32.mrb[0].mxu0
        %v897 = vadd.f32 0.0, %v896
        %v898 = vpop.f32.mrb[0].mxu0
        %v899 = vpop.f32.mrb[0].mxu0
        %v900 = vadd.f32 0.0, %v899
        %v901 = vpop.f32.mrb[0].mxu0
        %902 = vmatprep.mubr.bf16.mxu0 %v596
        %903 = vmatmul.mubr.bf16.gmra.mrb[0].mxu0 %v595
        %v904 = vpop.f32.mrb[0].mxu0
        %v905 = vadd.f32 0.0, %v904
        %v906 = vpop.f32.mrb[0].mxu0
        %v907 = vpop.f32.mrb[0].mxu0
        %v908 = vadd.f32 0.0, %v907
        %v909 = vpop.f32.mrb[0].mxu0
        %910 = vmatprep.mubr.bf16.mxu0 %v599
        %911 = vmatmul.mubr.bf16.gmra.mrb[0].mxu0 %v598
        %v912 = vpop.f32.mrb[0].mxu0
        %v913 = vadd.f32 0.0, %v912
        %v914 = vpop.f32.mrb[0].mxu0
        %v915 = vpop.f32.mrb[0].mxu0
        %v916 = vadd.f32 0.0, %v915
        %v917 = vpop.f32.mrb[0].mxu0
        %918 = vmatprep.mubr.bf16.mxu0 %v602
        %919 = vmatmul.mubr.bf16.gmra.mrb[0].mxu0 %v601
        %v920 = vpop.f32.mrb[0].mxu0
        %v921 = vadd.f32 0.0, %v920
        %v922 = vpop.f32.mrb[0].mxu0
        %v923 = vpop.f32.mrb[0].mxu0
        %v924 = vadd.f32 0.0, %v923
        %v925 = vpop.f32.mrb[0].mxu0
        %926 = vmatprep.mubr.bf16.mxu0 %v605
        %927 = vmatmul.mubr.bf16.gmra.mrb[0].mxu0 %v604
        %v928 = vpop.f32.mrb[0].mxu0
        %v929 = vadd.f32 0.0, %v928
        %v930 = vpop.f32.mrb[0].mxu0
        %v931 = vpop.f32.mrb[0].mxu0
        %v932 = vadd.f32 0.0, %v931
        %v933 = vpop.f32.mrb[0].mxu0
        %934 = vmatprep.mubr.bf16.mxu0 %v608
        %935 = vmatmul.mubr.bf16.gmra.mrb[0].mxu0 %v607
        %v936 = vpop.f32.mrb[0].mxu0
        %v937 = vadd.f32 0.0, %v936
        %v938 = vpop.f32.mrb[0].mxu0
        %v939 = vpop.f32.mrb[0].mxu0
        %v940 = vadd.f32 0.0, %v939
        %v941 = vpop.f32.mrb[0].mxu0
        %942 = vmatprep.mubr.bf16.mxu0 %v611
        %943 = vmatmul.mubr.bf16.gmra.mrb[0].mxu0 %v610
        %v944 = vpop.f32.mrb[0].mxu0
        %v945 = vadd.f32 0.0, %v944
        %v946 = vpop.f32.mrb[0].mxu0
        %v947 = vpop.f32.mrb[0].mxu0
        %v948 = vadd.f32 0.0, %v947
        %v949 = vpop.f32.mrb[0].mxu0
        %950 = vmatprep.mubr.bf16.mxu0 %v614
        %951 = vmatmul.mubr.bf16.gmra.mrb[0].mxu0 %v613
        %v952 = vpop.f32.mrb[0].mxu0
        %v953 = vadd.f32 0.0, %v952
        %v954 = vpop.f32.mrb[0].mxu0
        %v955 = vpop.f32.mrb[0].mxu0
        %v956 = vadd.f32 0.0, %v955
        %v957 = vpop.f32.mrb[0].mxu0
        %958 = vmatprep.mubr.bf16.mxu0 %v617
        %959 = vmatmul.mubr.bf16.gmra.mrb[0].mxu0 %v616
        %v960 = vpop.f32.mrb[0].mxu0
        %v961 = vadd.f32 0.0, %v960
        %v962 = vpop.f32.mrb[0].mxu0
        %v963 = vpop.f32.mrb[0].mxu0
        %v964 = vadd.f32 0.0, %v963
        %v965 = vpop.f32.mrb[0].mxu0
        %966 = vmatprep.mubr.bf16.mxu0 %v620
        %967 = vmatmul.mubr.bf16.gmra.mrb[0].mxu0 %v619
        %v968 = vpop.f32.mrb[0].mxu0
        %v969 = vadd.f32 0.0, %v968
        %v970 = vpop.f32.mrb[0].mxu0
        %v971 = vpop.f32.mrb[0].mxu0
        %v972 = vadd.f32 0.0, %v971
        %v973 = vpop.f32.mrb[0].mxu0
        %974 = vdwg.mxu0
        %975 = vmatprep.subr.bf16.mxu0 0
        %976 = vmatpush1.bf16.msra.mxu0 %v782
        %977 = vmatprep.subr.bf16.mxu0 0
        %978 = vmatpush1.bf16.msra.mxu0 %v783
        %979 = vmatprep.subr.bf16.mxu0 0
        %980 = vmatpush1.bf16.msra.mxu0 %v784
        %981 = vmatprep.subr.bf16.mxu0 0
        %982 = vmatpush1.bf16.msra.mxu0 %v785
        %983 = vmatprep.subr.bf16.mxu0 0
        %984 = vmatpush1.bf16.msra.mxu0 %v786
        %985 = vmatprep.subr.bf16.mxu0 0
        %986 = vmatpush1.bf16.msra.mxu0 %v787
        %987 = vmatprep.subr.bf16.mxu0 0
        %988 = vmatpush1.bf16.msra.mxu0 %v788
        %989 = vmatprep.subr.bf16.mxu0 0
        %990 = vmatpush1.bf16.msra.mxu0 %v789
        %991 = vmatprep.subr.bf16.mxu0 0
        %992 = vmatpush1.bf16.msra.mxu0 0
        %993 = vmatprep.subr.bf16.mxu0 0
        %994 = vmatpush1.bf16.msra.mxu0 0
        %995 = vmatprep.subr.bf16.mxu0 0
        %996 = vmatpush1.bf16.msra.mxu0 0
        %997 = vmatprep.subr.bf16.mxu0 0
        %998 = vmatpush1.bf16.msra.mxu0 0
        %999 = vmatprep.subr.bf16.mxu0 0
        %1000 = vmatpush1.bf16.msra.mxu0 0
        %1001 = vmatprep.subr.bf16.mxu0 0
        %1002 = vmatpush1.bf16.msra.mxu0 0
        %1003 = vmatprep.subr.bf16.mxu0 0
        %1004 = vmatpush1.bf16.msra.mxu0 0
        %1005 = vmatprep.subr.bf16.mxu0 0
        %1006 = vmatpush1.bf16.msra.mxu0 0
        %1007 = vmatprep.mubr.bf16.mxu0 0
        %1008 = vmatmul.mubr.bf16.gmra.mrb[0].mxu0 %v576
        %v1009 = vpop.f32.mrb[0].mxu0
        %v1010 = vadd.f32 %v849, %v1009
        %v1011 = vpop.f32.mrb[0].mxu0
        %v1012 = vpop.f32.mrb[0].mxu0
        %v1013 = vadd.f32 %v852, %v1012
        %v1014 = vpop.f32.mrb[0].mxu0
        %1015 = vmatprep.mubr.bf16.mxu0 0
        %1016 = vmatmul.mubr.bf16.gmra.mrb[0].mxu0 %v579
        %v1017 = vpop.f32.mrb[0].mxu0
        %v1018 = vadd.f32 %v857, %v1017
        %v1019 = vpop.f32.mrb[0].mxu0
        %v1020 = vpop.f32.mrb[0].mxu0
        %v1021 = vadd.f32 %v860, %v1020
        %v1022 = vpop.f32.mrb[0].mxu0
        %1023 = vmatprep.mubr.bf16.mxu0 0
        %1024 = vmatmul.mubr.bf16.gmra.mrb[0].mxu0 %v582
        %v1025 = vpop.f32.mrb[0].mxu0
        %v1026 = vadd.f32 %v865, %v1025
        %v1027 = vpop.f32.mrb[0].mxu0
        %v1028 = vpop.f32.mrb[0].mxu0
        %v1029 = vadd.f32 %v868, %v1028
        %v1030 = vpop.f32.mrb[0].mxu0
        %1031 = vmatprep.mubr.bf16.mxu0 0
        %1032 = vmatmul.mubr.bf16.gmra.mrb[0].mxu0 %v585
        %v1033 = vpop.f32.mrb[0].mxu0
        %v1034 = vadd.f32 %v873, %v1033
        %v1035 = vpop.f32.mrb[0].mxu0
        %v1036 = vpop.f32.mrb[0].mxu0
        %v1037 = vadd.f32 %v876, %v1036
        %v1038 = vpop.f32.mrb[0].mxu0
        %1039 = vmatprep.mubr.bf16.mxu0 0
        %1040 = vmatmul.mubr.bf16.gmra.mrb[0].mxu0 %v588
        %v1041 = vpop.f32.mrb[0].mxu0
        %v1042 = vadd.f32 %v881, %v1041
        %v1043 = vpop.f32.mrb[0].mxu0
        %v1044 = vpop.f32.mrb[0].mxu0
        %v1045 = vadd.f32 %v884, %v1044
        %v1046 = vpop.f32.mrb[0].mxu0
        %1047 = vmatprep.mubr.bf16.mxu0 0
        %1048 = vmatmul.mubr.bf16.gmra.mrb[0].mxu0 %v591
        %v1049 = vpop.f32.mrb[0].mxu0
        %v1050 = vadd.f32 %v889, %v1049
        %v1051 = vpop.f32.mrb[0].mxu0
        %v1052 = vpop.f32.mrb[0].mxu0
        %v1053 = vadd.f32 %v892, %v1052
        %v1054 = vpop.f32.mrb[0].mxu0
        %1055 = vmatprep.mubr.bf16.mxu0 0
        %1056 = vmatmul.mubr.bf16.gmra.mrb[0].mxu0 %v594
        %v1057 = vpop.f32.mrb[0].mxu0
        %v1058 = vadd.f32 %v897, %v1057
        %v1059 = vpop.f32.mrb[0].mxu0
        %v1060 = vpop.f32.mrb[0].mxu0
        %v1061 = vadd.f32 %v900, %v1060
        %v1062 = vpop.f32.mrb[0].mxu0
        %1063 = vmatprep.mubr.bf16.mxu0 0
        %1064 = vmatmul.mubr.bf16.gmra.mrb[0].mxu0 %v597
        %v1065 = vpop.f32.mrb[0].mxu0
        %v1066 = vadd.f32 %v905, %v1065
        %v1067 = vpop.f32.mrb[0].mxu0
        %v1068 = vpop.f32.mrb[0].mxu0
        %v1069 = vadd.f32 %v908, %v1068
        %v1070 = vpop.f32.mrb[0].mxu0
        %1071 = vmatprep.mubr.bf16.mxu0 0
        %1072 = vmatmul.mubr.bf16.gmra.mrb[0].mxu0 %v600
        %v1073 = vpop.f32.mrb[0].mxu0
        %v1074 = vadd.f32 %v913, %v1073
        %v1075 = vpop.f32.mrb[0].mxu0
        %v1076 = vpop.f32.mrb[0].mxu0
        %v1077 = vadd.f32 %v916, %v1076
        %v1078 = vpop.f32.mrb[0].mxu0
        %1079 = vmatprep.mubr.bf16.mxu0 0
        %1080 = vmatmul.mubr.bf16.gmra.mrb[0].mxu0 %v603
        %v1081 = vpop.f32.mrb[0].mxu0
        %v1082 = vadd.f32 %v921, %v1081
        %v1083 = vpop.f32.mrb[0].mxu0
        %v1084 = vpop.f32.mrb[0].mxu0
        %v1085 = vadd.f32 %v924, %v1084
        %v1086 = vpop.f32.mrb[0].mxu0
        %1087 = vmatprep.mubr.bf16.mxu0 0
        %1088 = vmatmul.mubr.bf16.gmra.mrb[0].mxu0 %v606
        %v1089 = vpop.f32.mrb[0].mxu0
        %v1090 = vadd.f32 %v929, %v1089
        %v1091 = vpop.f32.mrb[0].mxu0
        %v1092 = vpop.f32.mrb[0].mxu0
        %v1093 = vadd.f32 %v932, %v1092
        %v1094 = vpop.f32.mrb[0].mxu0
        %1095 = vmatprep.mubr.bf16.mxu0 0
        %1096 = vmatmul.mubr.bf16.gmra.mrb[0].mxu0 %v609
        %v1097 = vpop.f32.mrb[0].mxu0
        %v1098 = vadd.f32 %v937, %v1097
        %v1099 = vpop.f32.mrb[0].mxu0
        %v1100 = vpop.f32.mrb[0].mxu0
        %v1101 = vadd.f32 %v940, %v1100
        %v1102 = vpop.f32.mrb[0].mxu0
        %1103 = vmatprep.mubr.bf16.mxu0 0
        %1104 = vmatmul.mubr.bf16.gmra.mrb[0].mxu0 %v612
        %v1105 = vpop.f32.mrb[0].mxu0
        %v1106 = vadd.f32 %v945, %v1105
        %v1107 = vpop.f32.mrb[0].mxu0
        %v1108 = vpop.f32.mrb[0].mxu0
        %v1109 = vadd.f32 %v948, %v1108
        %v1110 = vpop.f32.mrb[0].mxu0
        %1111 = vmatprep.mubr.bf16.mxu0 0
        %1112 = vmatmul.mubr.bf16.gmra.mrb[0].mxu0 %v615
        %v1113 = vpop.f32.mrb[0].mxu0
        %v1114 = vadd.f32 %v953, %v1113
        %v1115 = vpop.f32.mrb[0].mxu0
        %v1116 = vpop.f32.mrb[0].mxu0
        %v1117 = vadd.f32 %v956, %v1116
        %v1118 = vpop.f32.mrb[0].mxu0
        %1119 = vmatprep.mubr.bf16.mxu0 0
        %1120 = vmatmul.mubr.bf16.gmra.mrb[0].mxu0 %v618
        %v1121 = vpop.f32.mrb[0].mxu0
        %v1122 = vadd.f32 %v961, %v1121
        %v1123 = vpop.f32.mrb[0].mxu0
        %v1124 = vpop.f32.mrb[0].mxu0
        %v1125 = vadd.f32 %v964, %v1124
        %v1126 = vpop.f32.mrb[0].mxu0
        %1127 = vmatprep.mubr.bf16.mxu0 0
        %1128 = vmatmul.mubr.bf16.gmra.mrb[0].mxu0 %v621
        %v1129 = vpop.f32.mrb[0].mxu0
        %v1130 = vadd.f32 %v969, %v1129
        %v1131 = vpop.f32.mrb[0].mxu0
        %v1132 = vpop.f32.mrb[0].mxu0
        %v1133 = vadd.f32 %v972, %v1132
        %v1134 = vpop.f32.mrb[0].mxu0
        %1135 = vdwg.mxu0
        %v1136 = vadd.f32 %v270, %v1010
        %v1137 = vadd.f32 %v271, %v1013
        %v1138 = vadd.f32 %v272, %v1018
        %v1139 = vadd.f32 %v273, %v1021
        %v1140 = vadd.f32 %v274, %v1026
        %v1141 = vadd.f32 %v275, %v1029
        %v1142 = vadd.f32 %v276, %v1034
        %v1143 = vadd.f32 %v277, %v1037
        %v1144 = vadd.f32 %v278, %v1042
        %v1145 = vadd.f32 %v279, %v1045
        %v1146 = vadd.f32 %v280, %v1050
        %v1147 = vadd.f32 %v281, %v1053
        %v1148 = vadd.f32 %v282, %v1058
        %v1149 = vadd.f32 %v283, %v1061
        %v1150 = vadd.f32 %v284, %v1066
        %v1151 = vadd.f32 %v285, %v1069
        %v1152 = vadd.f32 %v286, %v1074
        %v1153 = vadd.f32 %v287, %v1077
        %v1154 = vadd.f32 %v288, %v1082
        %v1155 = vadd.f32 %v289, %v1085
        %v1156 = vadd.f32 %v290, %v1090
        %v1157 = vadd.f32 %v291, %v1093
        %v1158 = vadd.f32 %v292, %v1098
        %v1159 = vadd.f32 %v293, %v1101
        %v1160 = vadd.f32 %v294, %v1106
        %v1161 = vadd.f32 %v295, %v1109
        %v1162 = vadd.f32 %v296, %v1114
        %v1163 = vadd.f32 %v297, %v1117
        %v1164 = vadd.f32 %v298, %v1122
        %v1165 = vadd.f32 %v299, %v1125
        %v1166 = vadd.f32 %v300, %v1130
        %v1167 = vadd.f32 %v301, %v1133
        %1168 = vst [vmem:[#allocation2] sm:$0xff] %v1136
        %1169 = vst [vmem:[#allocation2 + $0x8] sm:$0xff] %v1137
        %1170 = vst [vmem:[#allocation2 + $0x10] sm:$0xff] %v1138
        %1171 = vst [vmem:[#allocation2 + $0x18] sm:$0xff] %v1139
        %1172 = vst [vmem:[#allocation2 + $0x20] sm:$0xff] %v1140
        %1173 = vst [vmem:[#allocation2 + $0x28] sm:$0xff] %v1141
        %1174 = vst [vmem:[#allocation2 + $0x30] sm:$0xff] %v1142
        %1175 = vst [vmem:[#allocation2 + $0x38] sm:$0xff] %v1143
        %1176 = vst [vmem:[#allocation2 + $0x40] sm:$0xff] %v1144
        %1177 = vst [vmem:[#allocation2 + $0x48] sm:$0xff] %v1145
        %1178 = vst [vmem:[#allocation2 + $0x50] sm:$0xff] %v1146
        %1179 = vst [vmem:[#allocation2 + $0x58] sm:$0xff] %v1147
        %1180 = vst [vmem:[#allocation2 + $0x60] sm:$0xff] %v1148
        %1181 = vst [vmem:[#allocation2 + $0x68] sm:$0xff] %v1149
        %1182 = vst [vmem:[#allocation2 + $0x70] sm:$0xff] %v1150
        %1183 = vst [vmem:[#allocation2 + $0x78] sm:$0xff] %v1151
        %1184 = vst [vmem:[#allocation2 + $0x80] sm:$0xff] %v1152
        %1185 = vst [vmem:[#allocation2 + $0x88] sm:$0xff] %v1153
        %1186 = vst [vmem:[#allocation2 + $0x90] sm:$0xff] %v1154
        %1187 = vst [vmem:[#allocation2 + $0x98] sm:$0xff] %v1155
        %1188 = vst [vmem:[#allocation2 + $0xa0] sm:$0xff] %v1156
        %1189 = vst [vmem:[#allocation2 + $0xa8] sm:$0xff] %v1157
        %1190 = vst [vmem:[#allocation2 + $0xb0] sm:$0xff] %v1158
        %1191 = vst [vmem:[#allocation2 + $0xb8] sm:$0xff] %v1159
        %1192 = vst [vmem:[#allocation2 + $0xc0] sm:$0xff] %v1160
        %1193 = vst [vmem:[#allocation2 + $0xc8] sm:$0xff] %v1161
        %1194 = vst [vmem:[#allocation2 + $0xd0] sm:$0xff] %v1162
        %1195 = vst [vmem:[#allocation2 + $0xd8] sm:$0xff] %v1163
        %1196 = vst [vmem:[#allocation2 + $0xe0] sm:$0xff] %v1164
        %1197 = vst [vmem:[#allocation2 + $0xe8] sm:$0xff] %v1165
        %1198 = vst [vmem:[#allocation2 + $0xf0] sm:$0xff] %v1166
        %1199 = vst [vmem:[#allocation2 + $0xf8] sm:$0xff] %v1167
        // Predicated region
        $region45: #{tpu_custom_call.1} parent=31 // pred_check
          %p1200 = pneg %p234
        $region46: #{tpu_custom_call.1} parent=31 // pred_check_branch
          %1202 = sbr.rel (%p1200) target = $region48
        $region47: #{tpu_custom_call.1} parent=31 // pred_region
          %v1203 = vld [vmem:[#allocation2] sm:$0xff]
          %v1204 = vld [vmem:[#allocation2 + $0x8] sm:$0xff]
          %v1205 = vld [vmem:[#allocation2 + $0x10] sm:$0xff]
          %v1206 = vld [vmem:[#allocation2 + $0x18] sm:$0xff]
          %v1207 = vld [vmem:[#allocation2 + $0x20] sm:$0xff]
          %v1208 = vld [vmem:[#allocation2 + $0x28] sm:$0xff]
          %v1209 = vld [vmem:[#allocation2 + $0x30] sm:$0xff]
          %v1210 = vld [vmem:[#allocation2 + $0x38] sm:$0xff]
          %v1211 = vld [vmem:[#allocation2 + $0x40] sm:$0xff]
          %v1212 = vld [vmem:[#allocation2 + $0x48] sm:$0xff]
          %v1213 = vld [vmem:[#allocation2 + $0x50] sm:$0xff]
          %v1214 = vld [vmem:[#allocation2 + $0x58] sm:$0xff]
          %v1215 = vld [vmem:[#allocation2 + $0x60] sm:$0xff]
          %v1216 = vld [vmem:[#allocation2 + $0x68] sm:$0xff]
          %v1217 = vld [vmem:[#allocation2 + $0x70] sm:$0xff]
          %v1218 = vld [vmem:[#allocation2 + $0x78] sm:$0xff]
          %v1219 = vld [vmem:[#allocation2 + $0x80] sm:$0xff]
          %v1220 = vld [vmem:[#allocation2 + $0x88] sm:$0xff]
          %v1221 = vld [vmem:[#allocation2 + $0x90] sm:$0xff]
          %v1222 = vld [vmem:[#allocation2 + $0x98] sm:$0xff]
          %v1223 = vld [vmem:[#allocation2 + $0xa0] sm:$0xff]
          %v1224 = vld [vmem:[#allocation2 + $0xa8] sm:$0xff]
          %v1225 = vld [vmem:[#allocation2 + $0xb0] sm:$0xff]
          %v1226 = vld [vmem:[#allocation2 + $0xb8] sm:$0xff]
          %v1227 = vld [vmem:[#allocation2 + $0xc0] sm:$0xff]
          %v1228 = vld [vmem:[#allocation2 + $0xc8] sm:$0xff]
          %v1229 = vld [vmem:[#allocation2 + $0xd0] sm:$0xff]
          %v1230 = vld [vmem:[#allocation2 + $0xd8] sm:$0xff]
          %v1231 = vld [vmem:[#allocation2 + $0xe0] sm:$0xff]
          %v1232 = vld [vmem:[#allocation2 + $0xe8] sm:$0xff]
          %v1233 = vld [vmem:[#allocation2 + $0xf0] sm:$0xff]
          %v1234 = vld [vmem:[#allocation2 + $0xf8] sm:$0xff]
          %v1235 = vld [vmem:[%s2] sm:$0x1]
          %v1237 = vlaneseq
          %v1238 = vshrl.u32 %v1237, 7
          %v1239 = vsub.s32 0, %v1238
          %v1240 = vrot.slane %v1235, %v1239
          %v1242 = vadd.f32 %v1203, %v1240
          %v1243 = vadd.f32 %v1204, %v1240
          %v1244 = vadd.f32 %v1205, %v1240
          %v1245 = vadd.f32 %v1206, %v1240
          %v1246 = vadd.f32 %v1207, %v1240
          %v1247 = vadd.f32 %v1208, %v1240
          %v1248 = vadd.f32 %v1209, %v1240
          %v1249 = vadd.f32 %v1210, %v1240
          %v1250 = vadd.f32 %v1211, %v1240
          %v1251 = vadd.f32 %v1212, %v1240
          %v1252 = vadd.f32 %v1213, %v1240
          %v1253 = vadd.f32 %v1214, %v1240
          %v1254 = vadd.f32 %v1215, %v1240
          %v1255 = vadd.f32 %v1216, %v1240
          %v1256 = vadd.f32 %v1217, %v1240
          %v1257 = vadd.f32 %v1218, %v1240
          %v1258 = vadd.f32 %v1219, %v1240
          %v1259 = vadd.f32 %v1220, %v1240
          %v1260 = vadd.f32 %v1221, %v1240
          %v1261 = vadd.f32 %v1222, %v1240
          %v1262 = vadd.f32 %v1223, %v1240
          %v1263 = vadd.f32 %v1224, %v1240
          %v1264 = vadd.f32 %v1225, %v1240
          %v1265 = vadd.f32 %v1226, %v1240
          %v1266 = vadd.f32 %v1227, %v1240
          %v1267 = vadd.f32 %v1228, %v1240
          %v1268 = vadd.f32 %v1229, %v1240
          %v1269 = vadd.f32 %v1230, %v1240
          %v1270 = vadd.f32 %v1231, %v1240
          %v1271 = vadd.f32 %v1232, %v1240
          %v1272 = vadd.f32 %v1233, %v1240
          %v1273 = vadd.f32 %v1234, %v1240
          %v1274 = vmax.f32 %v1242, 0.0
          %v1275 = vmax.f32 %v1243, 0.0
          %v1276 = vmax.f32 %v1244, 0.0
          %v1277 = vmax.f32 %v1245, 0.0
          %v1278 = vmax.f32 %v1246, 0.0
          %v1279 = vmax.f32 %v1247, 0.0
          %v1280 = vmax.f32 %v1248, 0.0
          %v1281 = vmax.f32 %v1249, 0.0
          %v1282 = vmax.f32 %v1250, 0.0
          %v1283 = vmax.f32 %v1251, 0.0
          %v1284 = vmax.f32 %v1252, 0.0
          %v1285 = vmax.f32 %v1253, 0.0
          %v1286 = vmax.f32 %v1254, 0.0
          %v1287 = vmax.f32 %v1255, 0.0
          %v1288 = vmax.f32 %v1256, 0.0
          %v1289 = vmax.f32 %v1257, 0.0
          %v1290 = vmax.f32 %v1258, 0.0
          %v1291 = vmax.f32 %v1259, 0.0
          %v1292 = vmax.f32 %v1260, 0.0
          %v1293 = vmax.f32 %v1261, 0.0
          %v1294 = vmax.f32 %v1262, 0.0
          %v1295 = vmax.f32 %v1263, 0.0
          %v1296 = vmax.f32 %v1264, 0.0
          %v1297 = vmax.f32 %v1265, 0.0
          %v1298 = vmax.f32 %v1266, 0.0
          %v1299 = vmax.f32 %v1267, 0.0
          %v1300 = vmax.f32 %v1268, 0.0
          %v1301 = vmax.f32 %v1269, 0.0
          %v1302 = vmax.f32 %v1270, 0.0
          %v1303 = vmax.f32 %v1271, 0.0
          %v1304 = vmax.f32 %v1272, 0.0
          %v1305 = vmax.f32 %v1273, 0.0
          %1306 = vst [vmem:[%s228] sm:$0xff] %v1274
          %1307 = vst [vmem:[%s228 + $0x8] sm:$0xff] %v1275
          %1308 = vst [vmem:[%s228 + $0x10] sm:$0xff] %v1276
          %1309 = vst [vmem:[%s228 + $0x18] sm:$0xff] %v1277
          %1310 = vst [vmem:[%s228 + $0x20] sm:$0xff] %v1278
          %1311 = vst [vmem:[%s228 + $0x28] sm:$0xff] %v1279
          %1312 = vst [vmem:[%s228 + $0x30] sm:$0xff] %v1280
          %1313 = vst [vmem:[%s228 + $0x38] sm:$0xff] %v1281
          %1314 = vst [vmem:[%s228 + $0x40] sm:$0xff] %v1282
          %1315 = vst [vmem:[%s228 + $0x48] sm:$0xff] %v1283
          %1316 = vst [vmem:[%s228 + $0x50] sm:$0xff] %v1284
          %1317 = vst [vmem:[%s228 + $0x58] sm:$0xff] %v1285
          %1318 = vst [vmem:[%s228 + $0x60] sm:$0xff] %v1286
          %1319 = vst [vmem:[%s228 + $0x68] sm:$0xff] %v1287
          %1320 = vst [vmem:[%s228 + $0x70] sm:$0xff] %v1288
          %1321 = vst [vmem:[%s228 + $0x78] sm:$0xff] %v1289
          %1322 = vst [vmem:[%s228 + $0x80] sm:$0xff] %v1290
          %1323 = vst [vmem:[%s228 + $0x88] sm:$0xff] %v1291
          %1324 = vst [vmem:[%s228 + $0x90] sm:$0xff] %v1292
          %1325 = vst [vmem:[%s228 + $0x98] sm:$0xff] %v1293
          %1326 = vst [vmem:[%s228 + $0xa0] sm:$0xff] %v1294
          %1327 = vst [vmem:[%s228 + $0xa8] sm:$0xff] %v1295
          %1328 = vst [vmem:[%s228 + $0xb0] sm:$0xff] %v1296
          %1329 = vst [vmem:[%s228 + $0xb8] sm:$0xff] %v1297
          %1330 = vst [vmem:[%s228 + $0xc0] sm:$0xff] %v1298
          %1331 = vst [vmem:[%s228 + $0xc8] sm:$0xff] %v1299
          %1332 = vst [vmem:[%s228 + $0xd0] sm:$0xff] %v1300
          %1333 = vst [vmem:[%s228 + $0xd8] sm:$0xff] %v1301
          %1334 = vst [vmem:[%s228 + $0xe0] sm:$0xff] %v1302
          %1335 = vst [vmem:[%s228 + $0xe8] sm:$0xff] %v1303
          %1336 = vst [vmem:[%s228 + $0xf0] sm:$0xff] %v1304
          %1337 = vst [vmem:[%s228 + $0xf8] sm:$0xff] %v1305
        $region48: #{tpu_custom_call.1} parent=31 // pred_fallthru
          _
        %s1338 = sand.u32 %s116, 1
        %s1339 = scalar_lea.sflag [#allocation5], %s1338
        %s1340 = sand.u32 %s116, 1
        %s1341 = smul.addr %s1340, 256
        %s1342 = scalar_lea.vmem [#allocation8], %s1341
        // Predicated region
        $region49: #{tpu_custom_call.1} parent=31 // pred_check
          %p1343 = pneg %p126
        $region50: #{tpu_custom_call.1} parent=31 // pred_check_branch
          %1345 = sbr.rel (%p1343) target = $region52
        $region51: #{tpu_custom_call.1} parent=31 // pred_region
          %s1346 = smul.u32 32, %s25
          %s1348 = ssub.s32 4096, 4096
          %1349 = vsyncadd %s1339, %s1348
          %s1350 = smul.addr %s1346, 128
          %s1351 = scalar_lea.hbm %s3, %s1350
          %s1352 = sshll.u32 %s1342, 4
          %s1353 = int_to_ptr.vmem [resolvable:$true] %s1352
          %1358 = dma.vmem_to_hbm [thread:$0]  %s1353, 4096, %s1351, %s1339, 128, 128, 8
        $region52: #{tpu_custom_call.1} parent=31 // pred_fallthru
          _
      $region32: #{tpu_custom_call.1} parent=5 // pred_fallthru
        _
      %p1359 = scmp.le.s32.totalorder 2, %s16
      // Predicated region
      $region53: #{tpu_custom_call.1} parent=5 // pred_check
        %p1360 = pneg %p1359
      $region54: #{tpu_custom_call.1} parent=5 // pred_check_branch
        %1362 = sbr.rel (%p1360) target = $region56
      $region55: #{tpu_custom_call.1} parent=5 // pred_region
        %s1363 = ssub.s32 %s16, 2
        // Predicated region
        $region57: #{tpu_custom_call.1} parent=55 // pred_check
          %p1364 = pneg %p132
        $region58: #{tpu_custom_call.1} parent=55 // pred_check_branch
          %1366 = sbr.rel (%p1364) target = $region60
        $region59: #{tpu_custom_call.1} parent=55 // pred_region
          %s1367 = sand.u32 %s117, 1
          %s1368 = scalar_lea.sflag [#allocation5], %s1367
          %s1369 = sand.u32 %s117, 1
          %s1370 = smul.addr %s1369, 256
          %s1371 = scalar_lea.vmem [#allocation8], %s1370
          %1372 = dma.done %s1368, 4096
        $region60: #{tpu_custom_call.1} parent=55 // pred_fallthru
          _
      $region56: #{tpu_custom_call.1} parent=5 // pred_fallthru
        _
    $region6: #{tpu_custom_call.1} parent=1 // loop_footer
      %s20 = sadd.s32 1, %s16
    $region7: #{tpu_custom_call.1} parent=1 // loop_footer_branch
      %15 = sbr.rel target = $region3
    $region8: #{tpu_custom_call.1} parent=1 // loop_exit
      _
    %1373 = vsyncpa [#allocation4], 1
    %s1374 = scalar_lea.sflag [#allocation4], 1
    %1375 = vsyncpa %s1374, 1
    %1376 = vsyncpa [#allocation7], 1
    %1377 = vsyncpa [#allocation5], 1
    %s1378 = scalar_lea.sflag [#allocation5], 1
    %1379 = vsyncpa %s1378, 1

</llo_original>
